<compile_context>
chip_gen: v7x
topology: tpu7x:2x2x1
jax: 0.10.0
libtpu: 0.0.40
codegen_flags: <defaults>
</compile_context>

<pallas_src>
import functools
import math

import numpy as np

import jax
import jax.numpy as jnp
from jax.experimental import pallas as pl
from jax.experimental.pallas import tpu as pltpu


def _round_up(x, m):
    return ((x + m - 1) // m) * m


# ----------------------------- Pallas kernel ------------------------------ #
def _neumf_kernel(n_fc, *refs):
    """refs = (u_mlp, i_mlp, u_mf, i_mf,                 # (dm, TB) data blocks
               w0_u, w0_i, b0,                           # fc0 (pre-split, (out,in))
               w1, b1, ..., w_{n-1}, b_{n-1},            # remaining FC layers
               wlog_mlp, wlog_mf, blog,                  # logits head (pre-split)
               out)                                      # (1, TB)"""
    out_ref = refs[-1]
    u_mlp = refs[0][...]
    i_mlp = refs[1][...]
    u_mf = refs[2][...]
    i_mf = refs[3][...]
    w = refs[4:-1]

    # ---- MLP tower (feature-major: x is (features, TB)) --------------------
    w0_u, w0_i, b0 = w[0][...], w[1][...], w[2][...]
    x = jnp.dot(w0_u, u_mlp, preferred_element_type=jnp.float32)
    x = x + jnp.dot(w0_i, i_mlp, preferred_element_type=jnp.float32)
    x = jnp.maximum(x + b0, 0.0)                      # (layers[0], TB), fp32

    idx = 3
    for _ in range(1, n_fc):
        wl, bl = w[idx][...], w[idx + 1][...]
        idx += 2
        x = jnp.dot(wl, x.astype(wl.dtype), preferred_element_type=jnp.float32)
        x = jnp.maximum(x + bl, 0.0)

    # ---- MF branch: elementwise product (VPU) ------------------------------
    mf = u_mf * i_mf                                  # (dm_mf, TB)

    # ---- logits (split head) + stable sigmoid, all on (1, TB) --------------
    wlm, wlf, blog = w[idx][...], w[idx + 1][...], w[idx + 2][...]
    logits = jnp.dot(wlm, x.astype(wlm.dtype), preferred_element_type=jnp.float32)
    logits = logits + jnp.dot(wlf, mf.astype(wlf.dtype),
                              preferred_element_type=jnp.float32)
    logits = logits + blog                            # (1, TB), fp32

    neg = logits < 0.0
    z = jnp.exp(jnp.where(neg, logits, -logits))      # EUP, exp(-|logits|)
    d = 1.0 / (1.0 + z)
    out_ref[...] = jnp.where(neg, z * d, d).astype(out_ref.dtype)


# ------------------------------ forward wrapper ---------------------------- #
def neumf_forward(params, user_indices, item_indices, config, *,
                  block_batch=1024, compute_dtype=jnp.bfloat16):
    """Embedding gathers + weight plumbing in plain JAX, dense compute in one
    feature-major, batch-gridded pallas_call."""
    dm_mlp = config["latent_dim_mlp"]
    dm_mf = config["latent_dim_mf"]
    layers = list(config["layers"])
    n_fc = len(layers)
    l_last = layers[-1]

    b = user_indices.shape[0]
    # The batch lives on the 128-lane axis: tile must be a multiple of 128.
    # Clamp so tiny batches don't pad all the way up to block_batch.
    tb = _round_up(max(128, min(int(block_batch), _round_up(b, 128))), 128)
    b_pad = _round_up(b, tb)
    grid = b_pad // tb

    if b_pad != b:
        user_indices = jnp.pad(user_indices, (0, b_pad - b))   # row 0 is valid
        item_indices = jnp.pad(item_indices, (0, b_pad - b))

    # 2 gathers (tables packed [mlp | mf]) -> feature-major (dm, B_pad) halves.
    u_t = jnp.take(params["emb_user"], user_indices, axis=0).T.astype(compute_dtype)
    i_t = jnp.take(params["emb_item"], item_indices, axis=0).T.astype(compute_dtype)
    u_mlp_t, u_mf_t = u_t[:dm_mlp], u_t[dm_mlp:]
    i_mlp_t, i_mf_t = i_t[:dm_mlp], i_t[dm_mlp:]

    # fc0 split into user / item halves (weights kept in torch (out, in) layout).
    w0 = params["fc0_w"].astype(compute_dtype)                 # (layers[0], 2*dm_mlp)
    w0_u, w0_i = w0[:, :dm_mlp], w0[:, dm_mlp:]
    b0 = params["fc0_b"].reshape(-1, 1).astype(jnp.float32)    # (layers[0], 1)

    # Logits head split into MLP / MF contributions; no lane padding needed.
    w_log = params["logits_w"]                                 # (1, l_last + dm_mf)
    w_log_mlp = w_log[:, :l_last].astype(compute_dtype)        # (1, l_last)
    w_log_mf = w_log[:, l_last:].astype(compute_dtype)         # (1, dm_mf)
    b_log = params["logits_b"].reshape(1, 1).astype(jnp.float32)

    kernel_inputs = [u_mlp_t, i_mlp_t, u_mf_t, i_mf_t, w0_u, w0_i, b0]
    for l in range(1, n_fc):
        kernel_inputs.append(params[f"fc{l}_w"].astype(compute_dtype))   # (out, in)
        kernel_inputs.append(params[f"fc{l}_b"].reshape(-1, 1).astype(jnp.float32))
    kernel_inputs += [w_log_mlp, w_log_mf, b_log]

    def data_spec(arr):                 # (dm, B_pad) -> (dm, TB) block per step
        return pl.BlockSpec((arr.shape[0], tb), lambda i: (0, i))

    def resident_spec(arr):             # same block every step -> stays in VMEM
        return pl.BlockSpec(arr.shape, lambda i: (0, 0))

    in_specs = ([data_spec(x) for x in kernel_inputs[:4]]
                + [resident_spec(x) for x in kernel_inputs[4:]])
    out_specs = pl.BlockSpec((1, tb), lambda i: (0, i))

    # Advisory cost estimate for the XLA scheduler.
    dims = [2 * dm_mlp] + layers
    flops_per_col = sum(2 * a * c for a, c in zip(dims[:-1], dims[1:]))
    flops_per_col += 2 * (l_last + dm_mf) + dm_mf
    act_bytes = sum(int(np.prod(x.shape)) * x.dtype.itemsize for x in kernel_inputs[:4])
    weight_bytes = sum(int(np.prod(x.shape)) * x.dtype.itemsize for x in kernel_inputs[4:])
    bytes_accessed = act_bytes + weight_bytes + b_pad * 4      # + (1, B_pad) f32 out
    cost = pl.CostEstimate(flops=int(b_pad * flops_per_col),
                           transcendentals=int(b_pad),
                           bytes_accessed=int(bytes_accessed))

    kernel = functools.partial(_neumf_kernel, n_fc)

    out = pl.pallas_call(
        kernel,
        out_shape=jax.ShapeDtypeStruct((1, b_pad), jnp.float32),
        grid=(grid,),
        in_specs=in_specs,
        out_specs=out_specs,
        compiler_params=pltpu.CompilerParams(dimension_semantics=("parallel",)),
        cost_estimate=cost,
    )(*kernel_inputs)

    return out[0, :b].reshape(b, 1)


# --------------------------- parameter creation ---------------------------- #
def init_params(key, config, num_users, num_items):
    params = {}
    keys = iter(jax.random.split(key, 64))

    dm_mf = config["latent_dim_mf"]
    dm_mlp = config["latent_dim_mlp"]

    # Packed embedding tables: columns [0:dm_mlp) = MLP embedding, rest = MF.
    params["emb_user"] = jax.random.normal(
        next(keys), (num_users, dm_mlp + dm_mf), jnp.float32)
    params["emb_item"] = jax.random.normal(
        next(keys), (num_items, dm_mlp + dm_mf), jnp.float32)

    in_size = dm_mlp * 2
    for l, out_size in enumerate(config["layers"]):
        # torch Linear layout: W is (out, in), b is (out,).
        bound = 1.0 / math.sqrt(in_size)
        params[f"fc{l}_w"] = jax.random.uniform(
            next(keys), (out_size, in_size), jnp.float32, -bound, bound)
        params[f"fc{l}_b"] = jax.random.uniform(
            next(keys), (out_size,), jnp.float32, -bound, bound)
        in_size = out_size

    logit_in = config["layers"][-1] + dm_mf
    bound = 1.0 / math.sqrt(logit_in)
    params["logits_w"] = jax.random.uniform(
        next(keys), (1, logit_in), jnp.float32, -bound, bound)
    params["logits_b"] = jax.random.uniform(
        next(keys), (1,), jnp.float32, -bound, bound)
    return params


# -------------------------- pure-JAX reference ----------------------------- #
def neumf_reference(params, user_indices, item_indices, config):
    dm_mlp = config["latent_dim_mlp"]
    u = jnp.take(params["emb_user"], user_indices, axis=0)
    i = jnp.take(params["emb_item"], item_indices, axis=0)
    u_mlp, u_mf = u[:, :dm_mlp], u[:, dm_mlp:]
    i_mlp, i_mf = i[:, :dm_mlp], i[:, dm_mlp:]

    mf = u_mf * i_mf
    x = jnp.concatenate([u_mlp, i_mlp], axis=-1)
    for l in range(len(config["layers"])):
        x = jnp.maximum(x @ params[f"fc{l}_w"].T + params[f"fc{l}_b"], 0.0)
    v = jnp.concatenate([x, mf], axis=-1)
    logits = v @ params["logits_w"].T + params["logits_b"]
    return jax.nn.sigmoid(logits)


# --------------------------------- main ------------------------------------ #
if __name__ == "__main__":
    config = {
        "latent_dim_mf": 8,
        "latent_dim_mlp": 8,
        "layers": [32, 16, 8],
        "dropout_rate_mf": 0.0,
        "dropout_rate_mlp": 0.0,
    }
    num_users, num_items = 32, 48

    key = jax.random.PRNGKey(0)
    k_params, k_u, k_i = jax.random.split(key, 3)
    params = init_params(k_params, config, num_users, num_items)

    # --- small batch, fp32 compute path: tight check -------------------------
    batch = 8
    user_indices = jax.random.randint(k_u, (batch,), 0, num_users, jnp.int32)
    item_indices = jax.random.randint(k_i, (batch,), 0, num_items, jnp.int32)
    ref = neumf_reference(params, user_indices, item_indices, config)

    out_fp32 = jax.block_until_ready(
        neumf_forward(params, user_indices, item_indices, config,
                      block_batch=1024, compute_dtype=jnp.float32))
    assert out_fp32.shape == (batch, 1), out_fp32.shape
    assert jnp.allclose(out_fp32, ref, atol=1e-4, rtol=1e-4), (out_fp32, ref)

    # --- larger batch exercising grid > 1 + padding, bf16 production path ----
    batch2 = 300
    k_u2, k_i2 = jax.random.split(jax.random.PRNGKey(1))
    u2 = jax.random.randint(k_u2, (batch2,), 0, num_users, jnp.int32)
    i2 = jax.random.randint(k_i2, (batch2,), 0, num_items, jnp.int32)
    ref2 = neumf_reference(params, u2, i2, config)

    out_bf16 = jax.block_until_ready(
        neumf_forward(params, u2, i2, config,
                      block_batch=128, compute_dtype=jnp.bfloat16))
    assert out_bf16.shape == (batch2, 1), out_bf16.shape
    assert jnp.allclose(out_bf16, ref2, atol=5e-2), (out_bf16, ref2)

    print("KERNEL_OK")
</pallas_src>

<mosaic_0001>
module attributes {stable_mosaic.version = 11 : i64} {
  func.func @_neumf_kernel(%arg0: i32, %arg1: memref<8x128xf32, #tpu.memory_space<vmem>>, %arg2: memref<8x128xf32, #tpu.memory_space<vmem>>, %arg3: memref<8x128xf32, #tpu.memory_space<vmem>>, %arg4: memref<8x128xf32, #tpu.memory_space<vmem>>, %arg5: memref<32x8xf32, #tpu.memory_space<vmem>>, %arg6: memref<32x8xf32, #tpu.memory_space<vmem>>, %arg7: memref<32x1xf32, #tpu.memory_space<vmem>>, %arg8: memref<16x32xf32, #tpu.memory_space<vmem>>, %arg9: memref<16x1xf32, #tpu.memory_space<vmem>>, %arg10: memref<8x16xf32, #tpu.memory_space<vmem>>, %arg11: memref<8x1xf32, #tpu.memory_space<vmem>>, %arg12: memref<1x8xf32, #tpu.memory_space<vmem>>, %arg13: memref<1x8xf32, #tpu.memory_space<vmem>>, %arg14: memref<1x1xf32, #tpu.memory_space<vmem>>, %arg15: memref<1x128xf32, #tpu.memory_space<vmem>>) attributes {dimension_semantics = [#tpu.dimension_semantics<parallel>], iteration_bounds = array<i64: 1>, scalar_prefetch = 0 : i64, scratch_operands = 0 : i64, tpu.core_type = #tpu.core_type<tc>, window_params = [{transform_indices = @transform_0, window_bounds = array<i64: 8, 128>}, {transform_indices = @transform_1, window_bounds = array<i64: 8, 128>}, {transform_indices = @transform_2, window_bounds = array<i64: 8, 128>}, {transform_indices = @transform_3, window_bounds = array<i64: 8, 128>}, {pipeline_mode = #tpu.pipeline_mode<synchronous>, transform_indices = @transform_4, window_bounds = array<i64: 32, 8>}, {pipeline_mode = #tpu.pipeline_mode<synchronous>, transform_indices = @transform_5, window_bounds = array<i64: 32, 8>}, {pipeline_mode = #tpu.pipeline_mode<synchronous>, transform_indices = @transform_6, window_bounds = array<i64: 32, 1>}, {pipeline_mode = #tpu.pipeline_mode<synchronous>, transform_indices = @transform_7, window_bounds = array<i64: 16, 32>}, {pipeline_mode = #tpu.pipeline_mode<synchronous>, transform_indices = @transform_8, window_bounds = array<i64: 16, 1>}, {pipeline_mode = #tpu.pipeline_mode<synchronous>, transform_indices = @transform_9, window_bounds = array<i64: 8, 16>}, {pipeline_mode = #tpu.pipeline_mode<synchronous>, transform_indices = @transform_10, window_bounds = array<i64: 8, 1>}, {pipeline_mode = #tpu.pipeline_mode<synchronous>, transform_indices = @transform_11, window_bounds = array<i64: 1, 8>}, {pipeline_mode = #tpu.pipeline_mode<synchronous>, transform_indices = @transform_12, window_bounds = array<i64: 1, 8>}, {pipeline_mode = #tpu.pipeline_mode<synchronous>, transform_indices = @transform_13, window_bounds = array<i64: 1, 1>}, {transform_indices = @transform_14, window_bounds = array<i64: 1, 128>}]} {
    %c0 = arith.constant 0 : index
    %c0_0 = arith.constant 0 : index
    %0 = vector.load %arg1[%c0, %c0_0] : memref<8x128xf32, #tpu.memory_space<vmem>>, vector<8x128xf32>
    %c0_1 = arith.constant 0 : index
    %c0_2 = arith.constant 0 : index
    %1 = vector.load %arg2[%c0_1, %c0_2] : memref<8x128xf32, #tpu.memory_space<vmem>>, vector<8x128xf32>
    %c0_3 = arith.constant 0 : index
    %c0_4 = arith.constant 0 : index
    %2 = vector.load %arg3[%c0_3, %c0_4] : memref<8x128xf32, #tpu.memory_space<vmem>>, vector<8x128xf32>
    %c0_5 = arith.constant 0 : index
    %c0_6 = arith.constant 0 : index
    %3 = vector.load %arg4[%c0_5, %c0_6] : memref<8x128xf32, #tpu.memory_space<vmem>>, vector<8x128xf32>
    %c0_7 = arith.constant 0 : index
    %c0_8 = arith.constant 0 : index
    %4 = vector.load %arg5[%c0_7, %c0_8] : memref<32x8xf32, #tpu.memory_space<vmem>>, vector<32x8xf32>
    %c0_9 = arith.constant 0 : index
    %c0_10 = arith.constant 0 : index
    %5 = vector.load %arg6[%c0_9, %c0_10] : memref<32x8xf32, #tpu.memory_space<vmem>>, vector<32x8xf32>
    %c0_11 = arith.constant 0 : index
    %c0_12 = arith.constant 0 : index
    %6 = vector.load %arg7[%c0_11, %c0_12] : memref<32x1xf32, #tpu.memory_space<vmem>>, vector<32x1xf32>
    %cst = arith.constant dense<0.000000e+00> : vector<32x128xf32>
    %7 = tpu.matmul %4, %0, %cst {dimension_numbers = #tpu.dot_dimension_numbers<[1], [0], [0], [1], [0, 0, 1, 1], [], []>} : vector<32x8xf32>, vector<8x128xf32>, vector<32x128xf32> -> vector<32x128xf32>
    %cst_13 = arith.constant dense<0.000000e+00> : vector<32x128xf32>
    %8 = tpu.matmul %5, %1, %cst_13 {dimension_numbers = #tpu.dot_dimension_numbers<[1], [0], [0], [1], [0, 0, 1, 1], [], []>} : vector<32x8xf32>, vector<8x128xf32>, vector<32x128xf32> -> vector<32x128xf32>
    %9 = arith.addf %7, %8 : vector<32x128xf32>
    %10 = vector.broadcast %6 : vector<32x1xf32> to vector<32x128xf32>
    %11 = arith.addf %9, %10 : vector<32x128xf32>
    %cst_14 = arith.constant 0.000000e+00 : f32
    %12 = vector.broadcast %cst_14 : f32 to vector<32x128xf32>
    %13 = arith.maximumf %11, %12 : vector<32x128xf32>
    %c0_15 = arith.constant 0 : index
    %c0_16 = arith.constant 0 : index
    %14 = vector.load %arg8[%c0_15, %c0_16] : memref<16x32xf32, #tpu.memory_space<vmem>>, vector<16x32xf32>
    %c0_17 = arith.constant 0 : index
    %c0_18 = arith.constant 0 : index
    %15 = vector.load %arg9[%c0_17, %c0_18] : memref<16x1xf32, #tpu.memory_space<vmem>>, vector<16x1xf32>
    %cst_19 = arith.constant dense<0.000000e+00> : vector<16x128xf32>
    %16 = tpu.matmul %14, %13, %cst_19 {dimension_numbers = #tpu.dot_dimension_numbers<[1], [0], [0], [1], [0, 0, 1, 1], [], []>} : vector<16x32xf32>, vector<32x128xf32>, vector<16x128xf32> -> vector<16x128xf32>
    %17 = vector.broadcast %15 : vector<16x1xf32> to vector<16x128xf32>
    %18 = arith.addf %16, %17 : vector<16x128xf32>
    %cst_20 = arith.constant 0.000000e+00 : f32
    %19 = vector.broadcast %cst_20 : f32 to vector<16x128xf32>
    %20 = arith.maximumf %18, %19 : vector<16x128xf32>
    %c0_21 = arith.constant 0 : index
    %c0_22 = arith.constant 0 : index
    %21 = vector.load %arg10[%c0_21, %c0_22] : memref<8x16xf32, #tpu.memory_space<vmem>>, vector<8x16xf32>
    %c0_23 = arith.constant 0 : index
    %c0_24 = arith.constant 0 : index
    %22 = vector.load %arg11[%c0_23, %c0_24] : memref<8x1xf32, #tpu.memory_space<vmem>>, vector<8x1xf32>
    %cst_25 = arith.constant dense<0.000000e+00> : vector<8x128xf32>
    %23 = tpu.matmul %21, %20, %cst_25 {dimension_numbers = #tpu.dot_dimension_numbers<[1], [0], [0], [1], [0, 0, 1, 1], [], []>} : vector<8x16xf32>, vector<16x128xf32>, vector<8x128xf32> -> vector<8x128xf32>
    %24 = vector.broadcast %22 : vector<8x1xf32> to vector<8x128xf32>
    %25 = arith.addf %23, %24 : vector<8x128xf32>
    %cst_26 = arith.constant 0.000000e+00 : f32
    %26 = vector.broadcast %cst_26 : f32 to vector<8x128xf32>
    %27 = arith.maximumf %25, %26 : vector<8x128xf32>
    %28 = arith.mulf %2, %3 : vector<8x128xf32>
    %c0_27 = arith.constant 0 : index
    %c0_28 = arith.constant 0 : index
    %29 = vector.load %arg12[%c0_27, %c0_28] : memref<1x8xf32, #tpu.memory_space<vmem>>, vector<1x8xf32>
    %c0_29 = arith.constant 0 : index
    %c0_30 = arith.constant 0 : index
    %30 = vector.load %arg13[%c0_29, %c0_30] : memref<1x8xf32, #tpu.memory_space<vmem>>, vector<1x8xf32>
    %c0_31 = arith.constant 0 : index
    %c0_32 = arith.constant 0 : index
    %31 = vector.load %arg14[%c0_31, %c0_32] : memref<1x1xf32, #tpu.memory_space<vmem>>, vector<1x1xf32>
    %cst_33 = arith.constant dense<0.000000e+00> : vector<1x128xf32>
    %32 = tpu.matmul %29, %27, %cst_33 {dimension_numbers = #tpu.dot_dimension_numbers<[1], [0], [0], [1], [0, 0, 1, 1], [], []>} : vector<1x8xf32>, vector<8x128xf32>, vector<1x128xf32> -> vector<1x128xf32>
    %cst_34 = arith.constant dense<0.000000e+00> : vector<1x128xf32>
    %33 = tpu.matmul %30, %28, %cst_34 {dimension_numbers = #tpu.dot_dimension_numbers<[1], [0], [0], [1], [0, 0, 1, 1], [], []>} : vector<1x8xf32>, vector<8x128xf32>, vector<1x128xf32> -> vector<1x128xf32>
    %34 = arith.addf %32, %33 : vector<1x128xf32>
    %35 = vector.broadcast %31 : vector<1x1xf32> to vector<1x128xf32>
    %36 = arith.addf %34, %35 : vector<1x128xf32>
    %cst_35 = arith.constant 0.000000e+00 : f32
    %37 = vector.broadcast %cst_35 : f32 to vector<1x128xf32>
    %38 = arith.cmpf olt, %36, %37 : vector<1x128xf32>
    %cst_36 = arith.constant 0.000000e+00 : f32
    %39 = vector.broadcast %cst_36 : f32 to vector<1x128xf32>
    %40 = arith.subf %39, %36 : vector<1x128xf32>
    %41 = arith.select %38, %36, %40 : vector<1x128xi1>, vector<1x128xf32>
    %42 = math.exp %41 : vector<1x128xf32>
    %cst_37 = arith.constant 1.000000e+00 : f32
    %43 = vector.broadcast %cst_37 : f32 to vector<1x128xf32>
    %44 = arith.addf %43, %42 : vector<1x128xf32>
    %cst_38 = arith.constant 1.000000e+00 : f32
    %45 = vector.broadcast %cst_38 : f32 to vector<1x128xf32>
    %46 = arith.divf %45, %44 : vector<1x128xf32>
    %47 = arith.mulf %42, %46 : vector<1x128xf32>
    %48 = arith.select %38, %47, %46 : vector<1x128xi1>, vector<1x128xf32>
    %c0_39 = arith.constant 0 : index
    %c0_40 = arith.constant 0 : index
    %49 = vector.load %arg15[%c0_39, %c0_40] : memref<1x128xf32, #tpu.memory_space<vmem>>, vector<1x128xf32>
    tpu.vector_store %arg15[%c0_39, %c0_40], %48 {strides = array<i32>} : memref<1x128xf32, #tpu.memory_space<vmem>>, vector<1x128xf32>,
    return
  }
  func.func @transform_0(%arg0: i32) -> (i32, i32) {
    %c0_i32 = arith.constant 0 : i32
    %c0_i32_0 = arith.constant 0 : i32
    return %c0_i32, %arg0 : i32, i32
  }
  func.func @transform_1(%arg0: i32) -> (i32, i32) {
    %c0_i32 = arith.constant 0 : i32
    %c0_i32_0 = arith.constant 0 : i32
    return %c0_i32, %arg0 : i32, i32
  }
  func.func @transform_2(%arg0: i32) -> (i32, i32) {
    %c0_i32 = arith.constant 0 : i32
    %c0_i32_0 = arith.constant 0 : i32
    return %c0_i32, %arg0 : i32, i32
  }
  func.func @transform_3(%arg0: i32) -> (i32, i32) {
    %c0_i32 = arith.constant 0 : i32
    %c0_i32_0 = arith.constant 0 : i32
    return %c0_i32, %arg0 : i32, i32
  }
  func.func @transform_4(%arg0: i32) -> (i32, i32) {
    %c0_i32 = arith.constant 0 : i32
    %c0_i32_0 = arith.constant 0 : i32
    %c0_i32_1 = arith.constant 0 : i32
    return %c0_i32, %c0_i32_0 : i32, i32
  }
  func.func @transform_5(%arg0: i32) -> (i32, i32) {
    %c0_i32 = arith.constant 0 : i32
    %c0_i32_0 = arith.constant 0 : i32
    %c0_i32_1 = arith.constant 0 : i32
    return %c0_i32, %c0_i32_0 : i32, i32
  }
  func.func @transform_6(%arg0: i32) -> (i32, i32) {
    %c0_i32 = arith.constant 0 : i32
    %c0_i32_0 = arith.constant 0 : i32
    %c0_i32_1 = arith.constant 0 : i32
    return %c0_i32, %c0_i32_0 : i32, i32
  }
  func.func @transform_7(%arg0: i32) -> (i32, i32) {
    %c0_i32 = arith.constant 0 : i32
    %c0_i32_0 = arith.constant 0 : i32
    %c0_i32_1 = arith.constant 0 : i32
    return %c0_i32, %c0_i32_0 : i32, i32
  }
  func.func @transform_8(%arg0: i32) -> (i32, i32) {
    %c0_i32 = arith.constant 0 : i32
    %c0_i32_0 = arith.constant 0 : i32
    %c0_i32_1 = arith.constant 0 : i32
    return %c0_i32, %c0_i32_0 : i32, i32
  }
  func.func @transform_9(%arg0: i32) -> (i32, i32) {
    %c0_i32 = arith.constant 0 : i32
    %c0_i32_0 = arith.constant 0 : i32
    %c0_i32_1 = arith.constant 0 : i32
    return %c0_i32, %c0_i32_0 : i32, i32
  }
  func.func @transform_10(%arg0: i32) -> (i32, i32) {
    %c0_i32 = arith.constant 0 : i32
    %c0_i32_0 = arith.constant 0 : i32
    %c0_i32_1 = arith.constant 0 : i32
    return %c0_i32, %c0_i32_0 : i32, i32
  }
  func.func @transform_11(%arg0: i32) -> (i32, i32) {
    %c0_i32 = arith.constant 0 : i32
    %c0_i32_0 = arith.constant 0 : i32
    %c0_i32_1 = arith.constant 0 : i32
    return %c0_i32, %c0_i32_0 : i32, i32
  }
  func.func @transform_12(%arg0: i32) -> (i32, i32) {
    %c0_i32 = arith.constant 0 : i32
    %c0_i32_0 = arith.constant 0 : i32
    %c0_i32_1 = arith.constant 0 : i32
    return %c0_i32, %c0_i32_0 : i32, i32
  }
  func.func @transform_13(%arg0: i32) -> (i32, i32) {
    %c0_i32 = arith.constant 0 : i32
    %c0_i32_0 = arith.constant 0 : i32
    %c0_i32_1 = arith.constant 0 : i32
    return %c0_i32, %c0_i32_0 : i32, i32
  }
  func.func @transform_14(%arg0: i32) -> (i32, i32) {
    %c0_i32 = arith.constant 0 : i32
    %c0_i32_0 = arith.constant 0 : i32
    return %c0_i32, %arg0 : i32, i32
  }
}

</mosaic_0001>

<llo_original>
// kernel: tpu_custom_call.1
$region0: #{tpu_custom_call.1}
  #allocation0 [shape = 'u32[]', space=smem, size = 0x4, offset = 0x4, fixed_abs, tag = 'smem constant byte address 0x4 - core index']
  #allocation1 [shape = 'u32[144,128]{1,0:T(1,128)}', space=vmem, size = 0x12000, scoped, tag = 'internal scratch']
  #allocation2 [shape = 'f32[1,1]{1,0:T(1,128)S(1)}', space=vmem, size = 0x200, scoped, tag = 'scoped memory for tpu_custom_call.1']
  %s0 = inlined_call_operand.vmem [shape: f32[8,128], index: 0, kind: input, shape index: {}]
  %s1 = inlined_call_operand.vmem [shape: f32[8,128], index: 1, kind: input, shape index: {}]
  %s2 = inlined_call_operand.vmem [shape: f32[8,128], index: 2, kind: input, shape index: {}]
  %s3 = inlined_call_operand.vmem [shape: f32[8,128], index: 3, kind: input, shape index: {}]
  %s4 = inlined_call_operand.vmem [shape: f32[32,8], index: 4, kind: input, shape index: {}]
  %s5 = inlined_call_operand.vmem [shape: f32[32,8], index: 5, kind: input, shape index: {}]
  %s6 = inlined_call_operand.vmem [shape: f32[32,1], index: 6, kind: input, shape index: {}]
  %s7 = inlined_call_operand.vmem [shape: f32[16,32], index: 7, kind: input, shape index: {}]
  %s8 = inlined_call_operand.vmem [shape: f32[16,1], index: 8, kind: input, shape index: {}]
  %s9 = inlined_call_operand.vmem [shape: f32[8,16], index: 9, kind: input, shape index: {}]
  %s10 = inlined_call_operand.vmem [shape: f32[8,1], index: 10, kind: input, shape index: {}]
  %s11 = inlined_call_operand.vmem [shape: f32[1,8], index: 11, kind: input, shape index: {}]
  %s12 = inlined_call_operand.vmem [shape: f32[1,8], index: 12, kind: input, shape index: {}]
  %s13 = inlined_call_operand.<no memory space> [shape: f32[1,1], index: 13, kind: input, shape index: {}]
  %s14 = inlined_call_operand.hbm [shape: f32[1,128], index: 14, kind: output, shape index: {}]
  %s15 = sld [smem:[#allocation0]]
  $region66: #{tpu_custom_call.1} parent=0
    _
  %s17 = ssub.s32 1, %s15
  %s18 = scalar_select 0, %s17, %s15
  %v19 = vstv %s13
  %20 = vst [vmem:[#allocation2] sm:$0x1] %v19
  $region1: #{tpu_custom_call.1} parent=0
    #allocation3 [shape = 'u8[512]{0}', space=vmem, size = 0x400, scoped, tag = 'output window, operand 0, single buffered']
    #allocation4 [shape = 's32[1]{0}', space=sflag, size = 0x4, scoped, tag = 'scoped memory for tpu_custom_call.1']
    %21 = vsyncpa [#allocation4], 0
    // Predicated region
    $region2: #{tpu_custom_call.1} parent=1 // pred_check
      _
    $region3: #{tpu_custom_call.1} parent=1 // pred_check_branch
      %23 = sbr.rel (0) target = $region5
    $region4: #{tpu_custom_call.1} parent=1 // pred_region
      _
    $region5: #{tpu_custom_call.1} parent=1 // pred_fallthru
      _
    // Predicated region
    $region6: #{tpu_custom_call.1} parent=1 // pred_check
      _
    $region7: #{tpu_custom_call.1} parent=1 // pred_check_branch
      %25 = sbr.rel (0) target = $region9
    $region8: #{tpu_custom_call.1} parent=1 // pred_region
      _
    $region9: #{tpu_custom_call.1} parent=1 // pred_fallthru
      _
    // Predicated region
    $region10: #{tpu_custom_call.1} parent=1 // pred_check
      _
    $region11: #{tpu_custom_call.1} parent=1 // pred_check_branch
      %27 = sbr.rel (0) target = $region13
    $region12: #{tpu_custom_call.1} parent=1 // pred_region
      _
    $region13: #{tpu_custom_call.1} parent=1 // pred_fallthru
      _
    // Predicated region
    $region14: #{tpu_custom_call.1} parent=1 // pred_check
      _
    $region15: #{tpu_custom_call.1} parent=1 // pred_check_branch
      %29 = sbr.rel (0) target = $region17
    $region16: #{tpu_custom_call.1} parent=1 // pred_region
      _
    $region17: #{tpu_custom_call.1} parent=1 // pred_fallthru
      _
    // Predicated region
    $region18: #{tpu_custom_call.1} parent=1 // pred_check
      _
    $region19: #{tpu_custom_call.1} parent=1 // pred_check_branch
      %31 = sbr.rel (0) target = $region21
    $region20: #{tpu_custom_call.1} parent=1 // pred_region
      _
    $region21: #{tpu_custom_call.1} parent=1 // pred_fallthru
      _
    // Predicated region
    $region22: #{tpu_custom_call.1} parent=1 // pred_check
      _
    $region23: #{tpu_custom_call.1} parent=1 // pred_check_branch
      %33 = sbr.rel (0) target = $region25
    $region24: #{tpu_custom_call.1} parent=1 // pred_region
      _
    $region25: #{tpu_custom_call.1} parent=1 // pred_fallthru
      _
    // Predicated region
    $region26: #{tpu_custom_call.1} parent=1 // pred_check
      _
    $region27: #{tpu_custom_call.1} parent=1 // pred_check_branch
      %35 = sbr.rel (0) target = $region29
    $region28: #{tpu_custom_call.1} parent=1 // pred_region
      _
    $region29: #{tpu_custom_call.1} parent=1 // pred_fallthru
      _
    // Predicated region
    $region30: #{tpu_custom_call.1} parent=1 // pred_check
      _
    $region31: #{tpu_custom_call.1} parent=1 // pred_check_branch
      %37 = sbr.rel (0) target = $region33
    $region32: #{tpu_custom_call.1} parent=1 // pred_region
      _
    $region33: #{tpu_custom_call.1} parent=1 // pred_fallthru
      _
    // Predicated region
    $region34: #{tpu_custom_call.1} parent=1 // pred_check
      _
    $region35: #{tpu_custom_call.1} parent=1 // pred_check_branch
      %39 = sbr.rel (0) target = $region37
    $region36: #{tpu_custom_call.1} parent=1 // pred_region
      _
    $region37: #{tpu_custom_call.1} parent=1 // pred_fallthru
      _
    // Predicated region
    $region38: #{tpu_custom_call.1} parent=1 // pred_check
      _
    $region39: #{tpu_custom_call.1} parent=1 // pred_check_branch
      %41 = sbr.rel (0) target = $region41
    $region40: #{tpu_custom_call.1} parent=1 // pred_region
      _
    $region41: #{tpu_custom_call.1} parent=1 // pred_fallthru
      _
    // Predicated region
    $region42: #{tpu_custom_call.1} parent=1 // pred_check
      _
    $region43: #{tpu_custom_call.1} parent=1 // pred_check_branch
      %43 = sbr.rel (0) target = $region45
    $region44: #{tpu_custom_call.1} parent=1 // pred_region
      _
    $region45: #{tpu_custom_call.1} parent=1 // pred_fallthru
      _
    // Predicated region
    $region46: #{tpu_custom_call.1} parent=1 // pred_check
      _
    $region47: #{tpu_custom_call.1} parent=1 // pred_check_branch
      %45 = sbr.rel (0) target = $region49
    $region48: #{tpu_custom_call.1} parent=1 // pred_region
      _
    $region49: #{tpu_custom_call.1} parent=1 // pred_fallthru
      _
    // Predicated region
    $region50: #{tpu_custom_call.1} parent=1 // pred_check
      _
    $region51: #{tpu_custom_call.1} parent=1 // pred_check_branch
      %47 = sbr.rel (0) target = $region53
    $region52: #{tpu_custom_call.1} parent=1 // pred_region
      _
    $region53: #{tpu_custom_call.1} parent=1 // pred_fallthru
      _
    // Predicated region
    $region54: #{tpu_custom_call.1} parent=1 // pred_check
      _
    $region55: #{tpu_custom_call.1} parent=1 // pred_check_branch
      %49 = sbr.rel (0) target = $region57
    $region56: #{tpu_custom_call.1} parent=1 // pred_region
      _
    $region57: #{tpu_custom_call.1} parent=1 // pred_fallthru
      _
    %v50 = vld [vmem:[%s0] sm:$0xff]
    %v51 = vld [vmem:[%s1] sm:$0xff]
    %v52 = vld [vmem:[%s2] sm:$0xff]
    %v53 = vld [vmem:[%s3] sm:$0xff]
    %v54 = vld [vmem:[%s4] sm:$0xff]
    %v55 = vld [vmem:[%s4 + $0x8] sm:$0xff]
    %v56 = vld [vmem:[%s4 + $0x10] sm:$0xff]
    %v57 = vld [vmem:[%s4 + $0x18] sm:$0xff]
    %v58 = vld [vmem:[%s5] sm:$0xff]
    %v59 = vld [vmem:[%s5 + $0x8] sm:$0xff]
    %v60 = vld [vmem:[%s5 + $0x10] sm:$0xff]
    %v61 = vld [vmem:[%s5 + $0x18] sm:$0xff]
    %v62 = vld [vmem:[%s6] sm:$0xff]
    %v63 = vld [vmem:[%s6 + $0x8] sm:$0xff]
    %v64 = vld [vmem:[%s6 + $0x10] sm:$0xff]
    %v65 = vld [vmem:[%s6 + $0x18] sm:$0xff]
    %vm66 = vcmask 64512
    %v68 = vsel %vm66, %v58, 0
    %v71 = vsel %vm66, %v59, 0
    %v74 = vsel %vm66, %v60, 0
    %v77 = vsel %vm66, %v61, 0
    %79 = vmatprep.subr.mxu0 0.0
    %80 = vmatpush1.msra.mxu0 %v51
    %81 = vmatprep.subr.mxu0 0.0
    %82 = vmatpush1.msra.mxu0 0.0
    %83 = vmatprep.subr.mxu0 0.0
    %84 = vmatpush1.msra.mxu0 0.0
    %85 = vmatprep.subr.mxu0 0.0
    %86 = vmatpush1.msra.mxu0 0.0
    %87 = vmatprep.subr.mxu0 0.0
    %88 = vmatpush1.msra.mxu0 0.0
    %89 = vmatprep.subr.mxu0 0.0
    %90 = vmatpush1.msra.mxu0 0.0
    %91 = vmatprep.subr.mxu0 0.0
    %92 = vmatpush1.msra.mxu0 0.0
    %93 = vmatprep.subr.mxu0 0.0
    %94 = vmatpush1.msra.mxu0 0.0
    %95 = vmatprep.subr.mxu0 0.0
    %96 = vmatpush1.msra.mxu0 0.0
    %97 = vmatprep.subr.mxu0 0.0
    %98 = vmatpush1.msra.mxu0 0.0
    %99 = vmatprep.subr.mxu0 0.0
    %100 = vmatpush1.msra.mxu0 0.0
    %101 = vmatprep.subr.mxu0 0.0
    %102 = vmatpush1.msra.mxu0 0.0
    %103 = vmatprep.subr.mxu0 0.0
    %104 = vmatpush1.msra.mxu0 0.0
    %105 = vmatprep.subr.mxu0 0.0
    %106 = vmatpush1.msra.mxu0 0.0
    %107 = vmatprep.subr.mxu0 0.0
    %108 = vmatpush1.msra.mxu0 0.0
    %109 = vmatprep.subr.mxu0 0.0
    %110 = vmatpush1.msra.mxu0 0.0
    %111 = vmatprep.subr.mxu0 0.0
    %112 = vmatpush1.msra.mxu0 0.0
    %113 = vmatprep.subr.mxu0 0.0
    %114 = vmatpush1.msra.mxu0 0.0
    %115 = vmatprep.subr.mxu0 0.0
    %116 = vmatpush1.msra.mxu0 0.0
    %117 = vmatprep.subr.mxu0 0.0
    %118 = vmatpush1.msra.mxu0 0.0
    %119 = vmatprep.subr.mxu0 0.0
    %120 = vmatpush1.msra.mxu0 0.0
    %121 = vmatprep.subr.mxu0 0.0
    %122 = vmatpush1.msra.mxu0 0.0
    %123 = vmatprep.subr.mxu0 0.0
    %124 = vmatpush1.msra.mxu0 0.0
    %125 = vmatprep.subr.mxu0 0.0
    %126 = vmatpush1.msra.mxu0 0.0
    %127 = vmatprep.subr.mxu0 0.0
    %128 = vmatpush1.msra.mxu0 0.0
    %129 = vmatprep.subr.mxu0 0.0
    %130 = vmatpush1.msra.mxu0 0.0
    %131 = vmatprep.subr.mxu0 0.0
    %132 = vmatpush1.msra.mxu0 0.0
    %133 = vmatprep.subr.mxu0 0.0
    %134 = vmatpush1.msra.mxu0 0.0
    %135 = vmatprep.subr.mxu0 0.0
    %136 = vmatpush1.msra.mxu0 0.0
    %137 = vmatprep.subr.mxu0 0.0
    %138 = vmatpush1.msra.mxu0 0.0
    %139 = vmatprep.subr.mxu0 0.0
    %140 = vmatpush1.msra.mxu0 0.0
    %141 = vmatprep.subr.mxu0 0.0
    %142 = vmatpush1.msra.mxu0 0.0
    %143 = vmatprep.mubr.f32.mxu0 0.0
    %144 = vmatmul.mubr.f32.gmra.mrb[0].mxu0 %v68
    %v145 = vpop.f32.mrb[0].mxu0
    %v146 = vadd.f32 0.0, %v145
    %v147 = vpop.f32.mrb[0].mxu0
    %148 = vmatprep.mubr.f32.mxu0 0.0
    %149 = vmatmul.mubr.f32.gmra.mrb[0].mxu0 %v71
    %v150 = vpop.f32.mrb[0].mxu0
    %v151 = vadd.f32 0.0, %v150
    %v152 = vpop.f32.mrb[0].mxu0
    %153 = vmatprep.mubr.f32.mxu0 0.0
    %154 = vmatmul.mubr.f32.gmra.mrb[0].mxu0 %v74
    %v155 = vpop.f32.mrb[0].mxu0
    %v156 = vadd.f32 0.0, %v155
    %v157 = vpop.f32.mrb[0].mxu0
    %158 = vmatprep.mubr.f32.mxu0 0.0
    %159 = vmatmul.mubr.f32.gmra.mrb[0].mxu0 %v77
    %v160 = vpop.f32.mrb[0].mxu0
    %v161 = vadd.f32 0.0, %v160
    %v162 = vpop.f32.mrb[0].mxu0
    %163 = vdwg.mxu0
    %v165 = vsel %vm66, %v54, 0
    %v168 = vsel %vm66, %v55, 0
    %v171 = vsel %vm66, %v56, 0
    %v174 = vsel %vm66, %v57, 0
    %176 = vmatprep.subr.mxu0 0.0
    %177 = vmatpush1.msra.mxu0 %v50
    %178 = vmatprep.subr.mxu0 0.0
    %179 = vmatpush1.msra.mxu0 0.0
    %180 = vmatprep.subr.mxu0 0.0
    %181 = vmatpush1.msra.mxu0 0.0
    %182 = vmatprep.subr.mxu0 0.0
    %183 = vmatpush1.msra.mxu0 0.0
    %184 = vmatprep.subr.mxu0 0.0
    %185 = vmatpush1.msra.mxu0 0.0
    %186 = vmatprep.subr.mxu0 0.0
    %187 = vmatpush1.msra.mxu0 0.0
    %188 = vmatprep.subr.mxu0 0.0
    %189 = vmatpush1.msra.mxu0 0.0
    %190 = vmatprep.subr.mxu0 0.0
    %191 = vmatpush1.msra.mxu0 0.0
    %192 = vmatprep.subr.mxu0 0.0
    %193 = vmatpush1.msra.mxu0 0.0
    %194 = vmatprep.subr.mxu0 0.0
    %195 = vmatpush1.msra.mxu0 0.0
    %196 = vmatprep.subr.mxu0 0.0
    %197 = vmatpush1.msra.mxu0 0.0
    %198 = vmatprep.subr.mxu0 0.0
    %199 = vmatpush1.msra.mxu0 0.0
    %200 = vmatprep.subr.mxu0 0.0
    %201 = vmatpush1.msra.mxu0 0.0
    %202 = vmatprep.subr.mxu0 0.0
    %203 = vmatpush1.msra.mxu0 0.0
    %204 = vmatprep.subr.mxu0 0.0
    %205 = vmatpush1.msra.mxu0 0.0
    %206 = vmatprep.subr.mxu0 0.0
    %207 = vmatpush1.msra.mxu0 0.0
    %208 = vmatprep.subr.mxu0 0.0
    %209 = vmatpush1.msra.mxu0 0.0
    %210 = vmatprep.subr.mxu0 0.0
    %211 = vmatpush1.msra.mxu0 0.0
    %212 = vmatprep.subr.mxu0 0.0
    %213 = vmatpush1.msra.mxu0 0.0
    %214 = vmatprep.subr.mxu0 0.0
    %215 = vmatpush1.msra.mxu0 0.0
    %216 = vmatprep.subr.mxu0 0.0
    %217 = vmatpush1.msra.mxu0 0.0
    %218 = vmatprep.subr.mxu0 0.0
    %219 = vmatpush1.msra.mxu0 0.0
    %220 = vmatprep.subr.mxu0 0.0
    %221 = vmatpush1.msra.mxu0 0.0
    %222 = vmatprep.subr.mxu0 0.0
    %223 = vmatpush1.msra.mxu0 0.0
    %224 = vmatprep.subr.mxu0 0.0
    %225 = vmatpush1.msra.mxu0 0.0
    %226 = vmatprep.subr.mxu0 0.0
    %227 = vmatpush1.msra.mxu0 0.0
    %228 = vmatprep.subr.mxu0 0.0
    %229 = vmatpush1.msra.mxu0 0.0
    %230 = vmatprep.subr.mxu0 0.0
    %231 = vmatpush1.msra.mxu0 0.0
    %232 = vmatprep.subr.mxu0 0.0
    %233 = vmatpush1.msra.mxu0 0.0
    %234 = vmatprep.subr.mxu0 0.0
    %235 = vmatpush1.msra.mxu0 0.0
    %236 = vmatprep.subr.mxu0 0.0
    %237 = vmatpush1.msra.mxu0 0.0
    %238 = vmatprep.subr.mxu0 0.0
    %239 = vmatpush1.msra.mxu0 0.0
    %240 = vmatprep.mubr.f32.mxu0 0.0
    %241 = vmatmul.mubr.f32.gmra.mrb[0].mxu0 %v165
    %v242 = vpop.f32.mrb[0].mxu0
    %v243 = vadd.f32 %v146, %v242
    %v244 = vpop.f32.mrb[0].mxu0
    %245 = vmatprep.mubr.f32.mxu0 0.0
    %246 = vmatmul.mubr.f32.gmra.mrb[0].mxu0 %v168
    %v247 = vpop.f32.mrb[0].mxu0
    %v248 = vadd.f32 %v151, %v247
    %v249 = vpop.f32.mrb[0].mxu0
    %250 = vmatprep.mubr.f32.mxu0 0.0
    %251 = vmatmul.mubr.f32.gmra.mrb[0].mxu0 %v171
    %v252 = vpop.f32.mrb[0].mxu0
    %v253 = vadd.f32 %v156, %v252
    %v254 = vpop.f32.mrb[0].mxu0
    %255 = vmatprep.mubr.f32.mxu0 0.0
    %256 = vmatmul.mubr.f32.gmra.mrb[0].mxu0 %v174
    %v257 = vpop.f32.mrb[0].mxu0
    %v258 = vadd.f32 %v161, %v257
    %v259 = vpop.f32.mrb[0].mxu0
    %260 = vdwg.mxu0
    %262 = vset.pattern.permute.xlu0 0
    %263 = vperm.xlu0 %262, %v62
    %v264 = vpop.permute.xlu0 %263
    %267 = vset.pattern.permute.xlu0 0
    %268 = vperm.xlu0 %267, %v63
    %v269 = vpop.permute.xlu0 %268
    %272 = vset.pattern.permute.xlu0 0
    %273 = vperm.xlu0 %272, %v64
    %v274 = vpop.permute.xlu0 %273
    %277 = vset.pattern.permute.xlu0 0
    %278 = vperm.xlu0 %277, %v65
    %v279 = vpop.permute.xlu0 %278
    %v281 = vadd.f32 %v243, %v264
    %v282 = vadd.f32 %v248, %v269
    %v283 = vadd.f32 %v253, %v274
    %v284 = vadd.f32 %v258, %v279
    %v285 = vmax.f32 %v281, 0.0
    %v286 = vmax.f32 %v282, 0.0
    %v287 = vmax.f32 %v283, 0.0
    %v288 = vmax.f32 %v284, 0.0
    %v289 = vld [vmem:[%s7] sm:$0xff]
    %v290 = vld [vmem:[%s7 + $0x8] sm:$0xff]
    %v291 = vld [vmem:[%s8] sm:$0xff]
    %v292 = vld [vmem:[%s8 + $0x8] sm:$0xff]
    %294 = vset.pattern.permute.xlu0 0
    %295 = vperm.xlu0 %294, %v291
    %v296 = vpop.permute.xlu0 %295
    %299 = vset.pattern.permute.xlu0 0
    %300 = vperm.xlu0 %299, %v292
    %v301 = vpop.permute.xlu0 %300
    %vm303 = vcmask 261120
    %v305 = vsel %vm303, %v289, 0
    %v308 = vsel %vm303, %v290, 0
    %310 = vmatprep.subr.mxu0 0.0
    %311 = vmatpush1.msra.mxu0 %v285
    %312 = vmatprep.subr.mxu0 0.0
    %313 = vmatpush1.msra.mxu0 %v286
    %314 = vmatprep.subr.mxu0 0.0
    %315 = vmatpush1.msra.mxu0 %v287
    %316 = vmatprep.subr.mxu0 0.0
    %317 = vmatpush1.msra.mxu0 %v288
    %318 = vmatprep.subr.mxu0 0.0
    %319 = vmatpush1.msra.mxu0 0.0
    %320 = vmatprep.subr.mxu0 0.0
    %321 = vmatpush1.msra.mxu0 0.0
    %322 = vmatprep.subr.mxu0 0.0
    %323 = vmatpush1.msra.mxu0 0.0
    %324 = vmatprep.subr.mxu0 0.0
    %325 = vmatpush1.msra.mxu0 0.0
    %326 = vmatprep.subr.mxu0 0.0
    %327 = vmatpush1.msra.mxu0 0.0
    %328 = vmatprep.subr.mxu0 0.0
    %329 = vmatpush1.msra.mxu0 0.0
    %330 = vmatprep.subr.mxu0 0.0
    %331 = vmatpush1.msra.mxu0 0.0
    %332 = vmatprep.subr.mxu0 0.0
    %333 = vmatpush1.msra.mxu0 0.0
    %334 = vmatprep.subr.mxu0 0.0
    %335 = vmatpush1.msra.mxu0 0.0
    %336 = vmatprep.subr.mxu0 0.0
    %337 = vmatpush1.msra.mxu0 0.0
    %338 = vmatprep.subr.mxu0 0.0
    %339 = vmatpush1.msra.mxu0 0.0
    %340 = vmatprep.subr.mxu0 0.0
    %341 = vmatpush1.msra.mxu0 0.0
    %342 = vmatprep.subr.mxu0 0.0
    %343 = vmatpush1.msra.mxu0 0.0
    %344 = vmatprep.subr.mxu0 0.0
    %345 = vmatpush1.msra.mxu0 0.0
    %346 = vmatprep.subr.mxu0 0.0
    %347 = vmatpush1.msra.mxu0 0.0
    %348 = vmatprep.subr.mxu0 0.0
    %349 = vmatpush1.msra.mxu0 0.0
    %350 = vmatprep.subr.mxu0 0.0
    %351 = vmatpush1.msra.mxu0 0.0
    %352 = vmatprep.subr.mxu0 0.0
    %353 = vmatpush1.msra.mxu0 0.0
    %354 = vmatprep.subr.mxu0 0.0
    %355 = vmatpush1.msra.mxu0 0.0
    %356 = vmatprep.subr.mxu0 0.0
    %357 = vmatpush1.msra.mxu0 0.0
    %358 = vmatprep.subr.mxu0 0.0
    %359 = vmatpush1.msra.mxu0 0.0
    %360 = vmatprep.subr.mxu0 0.0
    %361 = vmatpush1.msra.mxu0 0.0
    %362 = vmatprep.subr.mxu0 0.0
    %363 = vmatpush1.msra.mxu0 0.0
    %364 = vmatprep.subr.mxu0 0.0
    %365 = vmatpush1.msra.mxu0 0.0
    %366 = vmatprep.subr.mxu0 0.0
    %367 = vmatpush1.msra.mxu0 0.0
    %368 = vmatprep.subr.mxu0 0.0
    %369 = vmatpush1.msra.mxu0 0.0
    %370 = vmatprep.subr.mxu0 0.0
    %371 = vmatpush1.msra.mxu0 0.0
    %372 = vmatprep.subr.mxu0 0.0
    %373 = vmatpush1.msra.mxu0 0.0
    %374 = vmatprep.mubr.f32.mxu0 0.0
    %375 = vmatmul.mubr.f32.gmra.mrb[0].mxu0 %v305
    %v376 = vpop.f32.mrb[0].mxu0
    %v377 = vadd.f32 %v296, %v376
    %v378 = vpop.f32.mrb[0].mxu0
    %379 = vmatprep.mubr.f32.mxu0 0.0
    %380 = vmatmul.mubr.f32.gmra.mrb[0].mxu0 %v308
    %v381 = vpop.f32.mrb[0].mxu0
    %v382 = vadd.f32 %v301, %v381
    %v383 = vpop.f32.mrb[0].mxu0
    %384 = vdwg.mxu0
    %v385 = vmax.f32 %v377, 0.0
    %v386 = vmax.f32 %v382, 0.0
    %v387 = vld [vmem:[%s9] sm:$0xff]
    %v388 = vld [vmem:[%s10] sm:$0xff]
    %390 = vset.pattern.permute.xlu0 0
    %391 = vperm.xlu0 %390, %v388
    %v392 = vpop.permute.xlu0 %391
    %vm394 = vcmask 130048
    %v396 = vsel %vm394, %v387, 0
    %398 = vmatprep.subr.mxu0 0.0
    %399 = vmatpush1.msra.mxu0 %v385
    %400 = vmatprep.subr.mxu0 0.0
    %401 = vmatpush1.msra.mxu0 %v386
    %402 = vmatprep.subr.mxu0 0.0
    %403 = vmatpush1.msra.mxu0 0.0
    %404 = vmatprep.subr.mxu0 0.0
    %405 = vmatpush1.msra.mxu0 0.0
    %406 = vmatprep.subr.mxu0 0.0
    %407 = vmatpush1.msra.mxu0 0.0
    %408 = vmatprep.subr.mxu0 0.0
    %409 = vmatpush1.msra.mxu0 0.0
    %410 = vmatprep.subr.mxu0 0.0
    %411 = vmatpush1.msra.mxu0 0.0
    %412 = vmatprep.subr.mxu0 0.0
    %413 = vmatpush1.msra.mxu0 0.0
    %414 = vmatprep.subr.mxu0 0.0
    %415 = vmatpush1.msra.mxu0 0.0
    %416 = vmatprep.subr.mxu0 0.0
    %417 = vmatpush1.msra.mxu0 0.0
    %418 = vmatprep.subr.mxu0 0.0
    %419 = vmatpush1.msra.mxu0 0.0
    %420 = vmatprep.subr.mxu0 0.0
    %421 = vmatpush1.msra.mxu0 0.0
    %422 = vmatprep.subr.mxu0 0.0
    %423 = vmatpush1.msra.mxu0 0.0
    %424 = vmatprep.subr.mxu0 0.0
    %425 = vmatpush1.msra.mxu0 0.0
    %426 = vmatprep.subr.mxu0 0.0
    %427 = vmatpush1.msra.mxu0 0.0
    %428 = vmatprep.subr.mxu0 0.0
    %429 = vmatpush1.msra.mxu0 0.0
    %430 = vmatprep.subr.mxu0 0.0
    %431 = vmatpush1.msra.mxu0 0.0
    %432 = vmatprep.subr.mxu0 0.0
    %433 = vmatpush1.msra.mxu0 0.0
    %434 = vmatprep.subr.mxu0 0.0
    %435 = vmatpush1.msra.mxu0 0.0
    %436 = vmatprep.subr.mxu0 0.0
    %437 = vmatpush1.msra.mxu0 0.0
    %438 = vmatprep.subr.mxu0 0.0
    %439 = vmatpush1.msra.mxu0 0.0
    %440 = vmatprep.subr.mxu0 0.0
    %441 = vmatpush1.msra.mxu0 0.0
    %442 = vmatprep.subr.mxu0 0.0
    %443 = vmatpush1.msra.mxu0 0.0
    %444 = vmatprep.subr.mxu0 0.0
    %445 = vmatpush1.msra.mxu0 0.0
    %446 = vmatprep.subr.mxu0 0.0
    %447 = vmatpush1.msra.mxu0 0.0
    %448 = vmatprep.subr.mxu0 0.0
    %449 = vmatpush1.msra.mxu0 0.0
    %450 = vmatprep.subr.mxu0 0.0
    %451 = vmatpush1.msra.mxu0 0.0
    %452 = vmatprep.subr.mxu0 0.0
    %453 = vmatpush1.msra.mxu0 0.0
    %454 = vmatprep.subr.mxu0 0.0
    %455 = vmatpush1.msra.mxu0 0.0
    %456 = vmatprep.subr.mxu0 0.0
    %457 = vmatpush1.msra.mxu0 0.0
    %458 = vmatprep.subr.mxu0 0.0
    %459 = vmatpush1.msra.mxu0 0.0
    %460 = vmatprep.subr.mxu0 0.0
    %461 = vmatpush1.msra.mxu0 0.0
    %462 = vmatprep.mubr.f32.mxu0 0.0
    %463 = vmatmul.mubr.f32.gmra.mrb[0].mxu0 %v396
    %v464 = vpop.f32.mrb[0].mxu0
    %v465 = vadd.f32 %v392, %v464
    %v466 = vpop.f32.mrb[0].mxu0
    %467 = vdwg.mxu0
    %v468 = vmax.f32 %v465, 0.0
    %v469 = vmul.f32 %v52, %v53
    %v470 = vld [vmem:[%s11] sm:$0x1]
    %v471 = vld [vmem:[%s12] sm:$0x1]
    %v472 = vld [vmem:[#allocation2] sm:$0x1]
    %v474 = vsel %vm66, %v471, 0
    %476 = vmatprep.subr.mxu0 0.0
    %477 = vmatpush1.msra.mxu0 %v469
    %478 = vmatprep.subr.mxu0 0.0
    %479 = vmatpush1.msra.mxu0 0.0
    %480 = vmatprep.subr.mxu0 0.0
    %481 = vmatpush1.msra.mxu0 0.0
    %482 = vmatprep.subr.mxu0 0.0
    %483 = vmatpush1.msra.mxu0 0.0
    %484 = vmatprep.subr.mxu0 0.0
    %485 = vmatpush1.msra.mxu0 0.0
    %486 = vmatprep.subr.mxu0 0.0
    %487 = vmatpush1.msra.mxu0 0.0
    %488 = vmatprep.subr.mxu0 0.0
    %489 = vmatpush1.msra.mxu0 0.0
    %490 = vmatprep.subr.mxu0 0.0
    %491 = vmatpush1.msra.mxu0 0.0
    %492 = vmatprep.subr.mxu0 0.0
    %493 = vmatpush1.msra.mxu0 0.0
    %494 = vmatprep.subr.mxu0 0.0
    %495 = vmatpush1.msra.mxu0 0.0
    %496 = vmatprep.subr.mxu0 0.0
    %497 = vmatpush1.msra.mxu0 0.0
    %498 = vmatprep.subr.mxu0 0.0
    %499 = vmatpush1.msra.mxu0 0.0
    %500 = vmatprep.subr.mxu0 0.0
    %501 = vmatpush1.msra.mxu0 0.0
    %502 = vmatprep.subr.mxu0 0.0
    %503 = vmatpush1.msra.mxu0 0.0
    %504 = vmatprep.subr.mxu0 0.0
    %505 = vmatpush1.msra.mxu0 0.0
    %506 = vmatprep.subr.mxu0 0.0
    %507 = vmatpush1.msra.mxu0 0.0
    %508 = vmatprep.subr.mxu0 0.0
    %509 = vmatpush1.msra.mxu0 0.0
    %510 = vmatprep.subr.mxu0 0.0
    %511 = vmatpush1.msra.mxu0 0.0
    %512 = vmatprep.subr.mxu0 0.0
    %513 = vmatpush1.msra.mxu0 0.0
    %514 = vmatprep.subr.mxu0 0.0
    %515 = vmatpush1.msra.mxu0 0.0
    %516 = vmatprep.subr.mxu0 0.0
    %517 = vmatpush1.msra.mxu0 0.0
    %518 = vmatprep.subr.mxu0 0.0
    %519 = vmatpush1.msra.mxu0 0.0
    %520 = vmatprep.subr.mxu0 0.0
    %521 = vmatpush1.msra.mxu0 0.0
    %522 = vmatprep.subr.mxu0 0.0
    %523 = vmatpush1.msra.mxu0 0.0
    %524 = vmatprep.subr.mxu0 0.0
    %525 = vmatpush1.msra.mxu0 0.0
    %526 = vmatprep.subr.mxu0 0.0
    %527 = vmatpush1.msra.mxu0 0.0
    %528 = vmatprep.subr.mxu0 0.0
    %529 = vmatpush1.msra.mxu0 0.0
    %530 = vmatprep.subr.mxu0 0.0
    %531 = vmatpush1.msra.mxu0 0.0
    %532 = vmatprep.subr.mxu0 0.0
    %533 = vmatpush1.msra.mxu0 0.0
    %534 = vmatprep.subr.mxu0 0.0
    %535 = vmatpush1.msra.mxu0 0.0
    %536 = vmatprep.subr.mxu0 0.0
    %537 = vmatpush1.msra.mxu0 0.0
    %538 = vmatprep.subr.mxu0 0.0
    %539 = vmatpush1.msra.mxu0 0.0
    %540 = vmatprep.mubr.f32.mxu0 0.0
    %541 = vmatmul.mubr.f32.gmra.mrb[0].mxu0 %v474
    %v542 = vpop.f32.mrb[0].mxu0
    %v543 = vadd.f32 0.0, %v542
    %v544 = vpop.f32.mrb[0].mxu0
    %545 = vdwg.mxu0
    %v547 = vsel %vm66, %v470, 0
    %549 = vmatprep.subr.mxu0 0.0
    %550 = vmatpush1.msra.mxu0 %v468
    %551 = vmatprep.subr.mxu0 0.0
    %552 = vmatpush1.msra.mxu0 0.0
    %553 = vmatprep.subr.mxu0 0.0
    %554 = vmatpush1.msra.mxu0 0.0
    %555 = vmatprep.subr.mxu0 0.0
    %556 = vmatpush1.msra.mxu0 0.0
    %557 = vmatprep.subr.mxu0 0.0
    %558 = vmatpush1.msra.mxu0 0.0
    %559 = vmatprep.subr.mxu0 0.0
    %560 = vmatpush1.msra.mxu0 0.0
    %561 = vmatprep.subr.mxu0 0.0
    %562 = vmatpush1.msra.mxu0 0.0
    %563 = vmatprep.subr.mxu0 0.0
    %564 = vmatpush1.msra.mxu0 0.0
    %565 = vmatprep.subr.mxu0 0.0
    %566 = vmatpush1.msra.mxu0 0.0
    %567 = vmatprep.subr.mxu0 0.0
    %568 = vmatpush1.msra.mxu0 0.0
    %569 = vmatprep.subr.mxu0 0.0
    %570 = vmatpush1.msra.mxu0 0.0
    %571 = vmatprep.subr.mxu0 0.0
    %572 = vmatpush1.msra.mxu0 0.0
    %573 = vmatprep.subr.mxu0 0.0
    %574 = vmatpush1.msra.mxu0 0.0
    %575 = vmatprep.subr.mxu0 0.0
    %576 = vmatpush1.msra.mxu0 0.0
    %577 = vmatprep.subr.mxu0 0.0
    %578 = vmatpush1.msra.mxu0 0.0
    %579 = vmatprep.subr.mxu0 0.0
    %580 = vmatpush1.msra.mxu0 0.0
    %581 = vmatprep.subr.mxu0 0.0
    %582 = vmatpush1.msra.mxu0 0.0
    %583 = vmatprep.subr.mxu0 0.0
    %584 = vmatpush1.msra.mxu0 0.0
    %585 = vmatprep.subr.mxu0 0.0
    %586 = vmatpush1.msra.mxu0 0.0
    %587 = vmatprep.subr.mxu0 0.0
    %588 = vmatpush1.msra.mxu0 0.0
    %589 = vmatprep.subr.mxu0 0.0
    %590 = vmatpush1.msra.mxu0 0.0
    %591 = vmatprep.subr.mxu0 0.0
    %592 = vmatpush1.msra.mxu0 0.0
    %593 = vmatprep.subr.mxu0 0.0
    %594 = vmatpush1.msra.mxu0 0.0
    %595 = vmatprep.subr.mxu0 0.0
    %596 = vmatpush1.msra.mxu0 0.0
    %597 = vmatprep.subr.mxu0 0.0
    %598 = vmatpush1.msra.mxu0 0.0
    %599 = vmatprep.subr.mxu0 0.0
    %600 = vmatpush1.msra.mxu0 0.0
    %601 = vmatprep.subr.mxu0 0.0
    %602 = vmatpush1.msra.mxu0 0.0
    %603 = vmatprep.subr.mxu0 0.0
    %604 = vmatpush1.msra.mxu0 0.0
    %605 = vmatprep.subr.mxu0 0.0
    %606 = vmatpush1.msra.mxu0 0.0
    %607 = vmatprep.subr.mxu0 0.0
    %608 = vmatpush1.msra.mxu0 0.0
    %609 = vmatprep.subr.mxu0 0.0
    %610 = vmatpush1.msra.mxu0 0.0
    %611 = vmatprep.subr.mxu0 0.0
    %612 = vmatpush1.msra.mxu0 0.0
    %613 = vmatprep.mubr.f32.mxu0 0.0
    %614 = vmatmul.mubr.f32.gmra.mrb[0].mxu0 %v547
    %v615 = vpop.f32.mrb[0].mxu0
    %v616 = vadd.f32 %v543, %v615
    %v617 = vpop.f32.mrb[0].mxu0
    %618 = vdwg.mxu0
    %620 = vset.pattern.permute.xlu0 0
    %621 = vperm.xlu0 %620, %v472
    %v622 = vpop.permute.xlu0 %621
    %v624 = vlaneseq
    %v625 = vshrl.u32 %v624, 7
    %v626 = vsub.s32 0, %v625
    %v627 = vrot.slane %v622, %v626
    %v628 = vadd.f32 %v616, %v627
    %vm629 = vcmp.lt.f32.partialorder %v628, 0.0
    %v630 = vsub.f32 0.0, %v628
    %v631 = vsel %vm629, %v628, %v630
    %v632 = vmul.f32 %v631, 1.442695
    %v633 = vpow.pop %v632
    %v634 = vadd.f32 %v633, 1.0
    %v635 = vrcp.pop %v634
    %v636 = vmul.f32 1.0, %v635
    %v637 = vmul.f32 %v633, %v636
    %v638 = vsel %vm629, %v637, %v636
    %639 = vst [vmem:[#allocation3] sm:$0x1] %v638
    // Predicated region
    $region58: #{tpu_custom_call.1} parent=1 // pred_check
      _
    $region59: #{tpu_custom_call.1} parent=1 // pred_check_branch
      %641 = sbr.rel (0) target = $region61
    $region60: #{tpu_custom_call.1} parent=1 // pred_region
      %s643 = ssub.s32 16, 16
      %644 = vsyncadd [#allocation4], %s643
      %s646 = sshll.u32 [#allocation3], 4
      %s647 = int_to_ptr.vmem [resolvable:$true] %s646
      %649 = dma.vmem_to_hbm [thread:$0]  %s647, 16, %s14, [#allocation4]
    $region61: #{tpu_custom_call.1} parent=1 // pred_fallthru
      _
    // Predicated region
    $region62: #{tpu_custom_call.1} parent=1 // pred_check
      _
    $region63: #{tpu_custom_call.1} parent=1 // pred_check_branch
      %651 = sbr.rel (0) target = $region65
    $region64: #{tpu_custom_call.1} parent=1 // pred_region
      %652 = dma.done [#allocation4], 16
    $region65: #{tpu_custom_call.1} parent=1 // pred_fallthru
      _
    %653 = vsyncpa [#allocation4], 1

</llo_original>
